<compile_context>
chip_gen: v7x
topology: tpu7x:2x2x1
jax: 0.10.0
libtpu: 0.0.40
codegen_flags: <defaults>
</compile_context>

<pallas_src>
import functools

import jax
import jax.numpy as jnp
from jax import lax
from jax.experimental import pallas as pl
from jax.experimental.pallas import tpu as pltpu


def _round_up(x, m):
    return ((x + m - 1) // m) * m


def _vmem_budget_bytes():
    """Generation-aware (working-set budget, vmem_limit_bytes)."""
    try:
        cap = int(pltpu.get_tpu_info().vmem_capacity_bytes)
    except Exception:
        cap = 64 * 1024 * 1024  # conservative default = v7x per-TC capacity
    if cap >= 100 * 1024 * 1024:                    # v5e / v6e: 128 MiB physical
        return 64 * 1024 * 1024, 96 * 1024 * 1024
    return 40 * 1024 * 1024, 48 * 1024 * 1024       # v7x: 64 MiB per TensorCore


def _pick_tile_m(M, K, E, out_itemsize, budget_bytes, weight_buffers=1,
                 min_steps=8):
    """Row-tile TM: as large as the VMEM budget allows, but capped so the grid
    keeps >= min_steps steps (pipelining + balanced megacore split)."""
    # Grid-invariant residents: weights (x buffer count) + f32 bias.
    fixed = weight_buffers * K * E * 2 + E * 4
    # Streamed bytes per output row: double-buffered bf16 input + output tile.
    per_row = 2 * K * 2 + 2 * E * out_itemsize
    tm_budget = max(8, ((budget_bytes - fixed) // max(per_row, 1)) // 8 * 8)
    tm_budget = min(tm_budget, 2048)
    # Cap so that cdiv(M, TM) >= min_steps (when M is large enough).
    tm_steps = _round_up(max(1, (M + min_steps - 1) // min_steps), 8)
    return int(max(8, min(tm_budget, tm_steps, _round_up(M, 8))))


def _patch_embed_kernel(p_ref, w_ref, b_ref, o_ref):
    # p_ref: (TM, K) bf16 streamed rows; w_ref: (K, E) bf16 resident weights;
    # b_ref: (1, E) f32 bias; o_ref: (TM, E) out_dtype.
    acc = jnp.dot(p_ref[...], w_ref[...], preferred_element_type=jnp.float32)
    o_ref[...] = (acc + b_ref[...]).astype(o_ref.dtype)


@functools.partial(
    jax.jit, static_argnames=("patch_size", "out_dtype", "single_buffer_weights"))
def _patch_embed_impl(x, weight, bias, *, patch_size, out_dtype,
                      single_buffer_weights):
    B, C, H, W = x.shape
    P = patch_size
    assert H % P == 0 and W % P == 0, "image size must be divisible by patch size"
    gh, gw = H // P, W // P
    E = weight.shape[0]
    K = C * P * P
    M = B * gh * gw

    cd = jnp.bfloat16
    # im2col in bf16 (single fused cast+transpose pass under jit); row ordering
    # (c, ph, pw) matches the OIHW weight reshape below.
    patches = (
        x.astype(cd)
        .reshape(B, C, gh, P, gw, P)
        .transpose(0, 2, 4, 1, 3, 5)          # (B, gh, gw, C, P, P)
        .reshape(M, K)
    )
    w2 = weight.astype(cd).reshape(E, K).T    # (K, E) bf16
    b2 = bias.astype(jnp.float32).reshape(1, E)

    out_dtype = jnp.dtype(out_dtype)
    out_itemsize = out_dtype.itemsize

    budget, vmem_limit = _vmem_budget_bytes()
    weight_buffers = 1 if single_buffer_weights else 2
    TM = _pick_tile_m(M, K, E, out_itemsize, budget,
                      weight_buffers=weight_buffers)
    grid = (pl.cdiv(M, TM),)   # ragged last block is clipped by Pallas (row-local op)

    resident_kwargs = (
        dict(pipeline_mode=pl.Buffered(1)) if single_buffer_weights else {})
    in_specs = [
        # Streamed patch rows; K is a full-extent block (exempt from 128 rule).
        pl.BlockSpec((TM, K), lambda i: (i, 0)),
        # Grid-invariant weights / bias: DMA'd once, kept VMEM-resident.
        pl.BlockSpec((K, E), lambda i: (0, 0), **resident_kwargs),
        pl.BlockSpec((1, E), lambda i: (0, 0), **resident_kwargs),
    ]
    # TODO(synk): on v7x, if per-step compute becomes very short, sweep
    # pipeline_mode=pl.Buffered(3) on the streamed input spec (review item 9).

    cost = pl.CostEstimate(
        flops=2 * M * K * E,
        transcendentals=0,
        bytes_accessed=(M * K * 2 + K * E * 2 + E * 4 + M * E * out_itemsize),
    )

    out = pl.pallas_call(
        _patch_embed_kernel,
        out_shape=jax.ShapeDtypeStruct((M, E), out_dtype),
        grid=grid,
        in_specs=in_specs,
        out_specs=pl.BlockSpec((TM, E), lambda i: (i, 0)),
        compiler_params=pltpu.CompilerParams(
            dimension_semantics=("parallel",),   # megacore split on v7x
            vmem_limit_bytes=vmem_limit,
        ),
        cost_estimate=cost,
    )(patches, w2, b2)

    # Equivalent of conv output (B, E, gh, gw).flatten(2).transpose(1, 2);
    # this reshape is contiguous (free).
    return out.reshape(B, gh * gw, E)


def patch_embed(x, weight, bias, *, patch_size, out_dtype=None):
    """timm PatchEmbed forward (dwt_level=0, flatten=True, norm=Identity).

    x: (B, C, H, W) NCHW.  weight: (E, C, P, P) OIHW.  bias: (E,).
    Returns (B, num_patches, E).  Pass out_dtype=jnp.bfloat16 to halve the
    output-side HBM traffic when the consumer is bf16 (f32 accumulation kept).
    """
    od = jnp.dtype(out_dtype if out_dtype is not None else x.dtype).name
    try:
        return _patch_embed_impl(x, weight, bias, patch_size=patch_size,
                                 out_dtype=od, single_buffer_weights=True)
    except Exception:
        # Fallback if this JAX build rejects pl.Buffered(1) on a pallas_call
        # BlockSpec: keep default double-buffered resident weights.
        return _patch_embed_impl(x, weight, bias, patch_size=patch_size,
                                 out_dtype=od, single_buffer_weights=False)


def _reference_patch_embed(x, weight, bias, patch_size):
    """Pure-JAX f32 reference: strided conv (NCHW/OIHW) + flatten + transpose."""
    y = lax.conv_general_dilated(
        x, weight,
        window_strides=(patch_size, patch_size),
        padding="VALID",
        dimension_numbers=("NCHW", "OIHW", "NCHW"),
    ) + bias.reshape(1, -1, 1, 1)
    B, E, gh, gw = y.shape
    return y.reshape(B, E, gh * gw).transpose(0, 2, 1)


if __name__ == "__main__":
    # Small, module-consistent shapes: img_size=16, patch_size=4, in_chans=4,
    # embed_dim=32.
    B, C, H, W = 2, 4, 16, 16
    P = 4
    EMBED = 32

    key = jax.random.PRNGKey(0)
    kx, kw, kb = jax.random.split(key, 3)

    x = jax.random.normal(kx, (B, C, H, W), dtype=jnp.float32)
    # Synthetic params for nn.Conv2d(in_chans, embed_dim, P, stride=P, bias=True)
    fan_in = C * P * P
    bound = 1.0 / (fan_in ** 0.5)
    weight = jax.random.uniform(kw, (EMBED, C, P, P), minval=-bound, maxval=bound,
                                dtype=jnp.float32)
    bias = jax.random.uniform(kb, (EMBED,), minval=-bound, maxval=bound,
                              dtype=jnp.float32)

    out = patch_embed(x, weight, bias, patch_size=P)
    out = jax.block_until_ready(out)

    ref = _reference_patch_embed(x, weight, bias, P)
    assert out.shape == (B, (H // P) * (W // P), EMBED)
    # bf16 inputs + f32 accumulation vs full-f32 reference: loose tolerance.
    err = float(jnp.max(jnp.abs(out.astype(jnp.float32) - ref)))
    assert err < 3e-2, err

    print("KERNEL_OK")
</pallas_src>

<mosaic_0001>
module attributes {stable_mosaic.version = 11 : i64} {
  func.func @_patch_embed_kernel(%arg0: i32, %arg1: memref<8x64xbf16, #tpu.memory_space<vmem>>, %arg2: memref<64x32xbf16, #tpu.memory_space<vmem>>, %arg3: memref<1x32xf32, #tpu.memory_space<vmem>>, %arg4: memref<8x32xf32, #tpu.memory_space<vmem>>) attributes {dimension_semantics = [#tpu.dimension_semantics<parallel>], iteration_bounds = array<i64: 4>, scalar_prefetch = 0 : i64, scratch_operands = 0 : i64, tpu.core_type = #tpu.core_type<tc>, window_params = [{transform_indices = @transform_0, window_bounds = array<i64: 8, 64>}, {pipeline_mode = #tpu.pipeline_mode<synchronous>, transform_indices = @transform_1, window_bounds = array<i64: 64, 32>}, {pipeline_mode = #tpu.pipeline_mode<synchronous>, transform_indices = @transform_2, window_bounds = array<i64: 1, 32>}, {transform_indices = @transform_3, window_bounds = array<i64: 8, 32>}]} {
    %c0 = arith.constant 0 : index
    %c0_0 = arith.constant 0 : index
    %0 = vector.load %arg1[%c0, %c0_0] : memref<8x64xbf16, #tpu.memory_space<vmem>>, vector<8x64xbf16>
    %c0_1 = arith.constant 0 : index
    %c0_2 = arith.constant 0 : index
    %1 = vector.load %arg2[%c0_1, %c0_2] : memref<64x32xbf16, #tpu.memory_space<vmem>>, vector<64x32xbf16>
    %cst = arith.constant dense<0.000000e+00> : vector<8x32xf32>
    %2 = tpu.matmul %0, %1, %cst {dimension_numbers = #tpu.dot_dimension_numbers<[1], [0], [0], [1], [0, 0, 1, 1], [], []>} : vector<8x64xbf16>, vector<64x32xbf16>, vector<8x32xf32> -> vector<8x32xf32>
    %c0_3 = arith.constant 0 : index
    %c0_4 = arith.constant 0 : index
    %3 = vector.load %arg3[%c0_3, %c0_4] : memref<1x32xf32, #tpu.memory_space<vmem>>, vector<1x32xf32>
    %4 = vector.broadcast %3 : vector<1x32xf32> to vector<8x32xf32>
    %5 = arith.addf %2, %4 : vector<8x32xf32>
    %c0_5 = arith.constant 0 : index
    %c0_6 = arith.constant 0 : index
    %6 = vector.load %arg4[%c0_5, %c0_6] : memref<8x32xf32, #tpu.memory_space<vmem>>, vector<8x32xf32>
    tpu.vector_store %arg4[%c0_5, %c0_6], %5 {strides = array<i32>} : memref<8x32xf32, #tpu.memory_space<vmem>>, vector<8x32xf32>,
    return
  }
  func.func @transform_0(%arg0: i32) -> (i32, i32) {
    %c0_i32 = arith.constant 0 : i32
    %c0_i32_0 = arith.constant 0 : i32
    return %arg0, %c0_i32 : i32, i32
  }
  func.func @transform_1(%arg0: i32) -> (i32, i32) {
    %c0_i32 = arith.constant 0 : i32
    %c0_i32_0 = arith.constant 0 : i32
    %c0_i32_1 = arith.constant 0 : i32
    return %c0_i32, %c0_i32_0 : i32, i32
  }
  func.func @transform_2(%arg0: i32) -> (i32, i32) {
    %c0_i32 = arith.constant 0 : i32
    %c0_i32_0 = arith.constant 0 : i32
    %c0_i32_1 = arith.constant 0 : i32
    return %c0_i32, %c0_i32_0 : i32, i32
  }
  func.func @transform_3(%arg0: i32) -> (i32, i32) {
    %c0_i32 = arith.constant 0 : i32
    %c0_i32_0 = arith.constant 0 : i32
    return %arg0, %c0_i32 : i32, i32
  }
}

module attributes {stable_mosaic.version = 11 : i64} {
  func.func @_patch_embed_kernel(%arg0: i32, %arg1: memref<8x64xbf16, #tpu.memory_space<vmem>>, %arg2: memref<64x32xbf16, #tpu.memory_space<vmem>>, %arg3: memref<1x32xf32, #tpu.memory_space<vmem>>, %arg4: memref<8x32xf32, #tpu.memory_space<vmem>>) attributes {dimension_semantics = [#tpu.dimension_semantics<parallel>], iteration_bounds = array<i64: 4>, scalar_prefetch = 0 : i64, scratch_operands = 0 : i64, tpu.core_type = #tpu.core_type<tc>, window_params = [{transform_indices = @transform_0, window_bounds = array<i64: 8, 64>}, {pipeline_mode = #tpu.pipeline_mode<synchronous>, transform_indices = @transform_1, window_bounds = array<i64: 64, 32>}, {pipeline_mode = #tpu.pipeline_mode<synchronous>, transform_indices = @transform_2, window_bounds = array<i64: 1, 32>}, {transform_indices = @transform_3, window_bounds = array<i64: 8, 32>}]} {
    %c0 = arith.constant 0 : index
    %c0_0 = arith.constant 0 : index
    %0 = vector.load %arg1[%c0, %c0_0] : memref<8x64xbf16, #tpu.memory_space<vmem>>, vector<8x64xbf16>
    %c0_1 = arith.constant 0 : index
    %c0_2 = arith.constant 0 : index
    %1 = vector.load %arg2[%c0_1, %c0_2] : memref<64x32xbf16, #tpu.memory_space<vmem>>, vector<64x32xbf16>
    %cst = arith.constant dense<0.000000e+00> : vector<8x32xf32>
    %2 = tpu.matmul %0, %1, %cst {dimension_numbers = #tpu.dot_dimension_numbers<[1], [0], [0], [1], [0, 0, 1, 1], [], []>} : vector<8x64xbf16>, vector<64x32xbf16>, vector<8x32xf32> -> vector<8x32xf32>
    %c0_3 = arith.constant 0 : index
    %c0_4 = arith.constant 0 : index
    %3 = vector.load %arg3[%c0_3, %c0_4] : memref<1x32xf32, #tpu.memory_space<vmem>>, vector<1x32xf32>
    %4 = vector.broadcast %3 : vector<1x32xf32> to vector<8x32xf32>
    %5 = arith.addf %2, %4 : vector<8x32xf32>
    %c0_5 = arith.constant 0 : index
    %c0_6 = arith.constant 0 : index
    %6 = vector.load %arg4[%c0_5, %c0_6] : memref<8x32xf32, #tpu.memory_space<vmem>>, vector<8x32xf32>
    tpu.vector_store %arg4[%c0_5, %c0_6], %5 {strides = array<i32>} : memref<8x32xf32, #tpu.memory_space<vmem>>, vector<8x32xf32>,
    return
  }
  func.func @transform_0(%arg0: i32) -> (i32, i32) {
    %c0_i32 = arith.constant 0 : i32
    %c0_i32_0 = arith.constant 0 : i32
    return %arg0, %c0_i32 : i32, i32
  }
  func.func @transform_1(%arg0: i32) -> (i32, i32) {
    %c0_i32 = arith.constant 0 : i32
    %c0_i32_0 = arith.constant 0 : i32
    %c0_i32_1 = arith.constant 0 : i32
    return %c0_i32, %c0_i32_0 : i32, i32
  }
  func.func @transform_2(%arg0: i32) -> (i32, i32) {
    %c0_i32 = arith.constant 0 : i32
    %c0_i32_0 = arith.constant 0 : i32
    %c0_i32_1 = arith.constant 0 : i32
    return %c0_i32, %c0_i32_0 : i32, i32
  }
  func.func @transform_3(%arg0: i32) -> (i32, i32) {
    %c0_i32 = arith.constant 0 : i32
    %c0_i32_0 = arith.constant 0 : i32
    return %arg0, %c0_i32 : i32, i32
  }
}

</mosaic_0001>

<llo_original>
// kernel: _patch_embed_impl.1
$region0: #{_patch_embed_impl.1}
  #allocation0 [shape = 'u32[]', space=smem, size = 0x4, offset = 0x4, fixed_abs, tag = 'smem constant byte address 0x4 - core index']
  #allocation1 [shape = 'u32[144,128]{1,0:T(1,128)}', space=vmem, size = 0x12000, scoped, tag = 'internal scratch']
  %s0 = inlined_call_operand.vmem [shape: bf16[32,64], index: 0, kind: input, shape index: {}]
  %s1 = inlined_call_operand.vmem [shape: bf16[64,32], index: 1, kind: input, shape index: {}]
  %s2 = inlined_call_operand.vmem [shape: f32[1,32], index: 2, kind: input, shape index: {}]
  %s3 = inlined_call_operand.hbm [shape: f32[32,32], index: 3, kind: output, shape index: {}]
  %s4 = sld [smem:[#allocation0]]
  $region45: #{_patch_embed_impl.1} parent=0
    _
  %s6 = ssub.s32 1, %s4
  %s7 = scalar_select 0, %s6, %s4
  $region1: #{_patch_embed_impl.1} parent=0
    #allocation2 [shape = 'u8[8192]{0}', space=vmem, size = 0x2000, scoped, tag = 'output window, operand 0']
    #allocation3 [shape = 's32[2]{0}', space=sflag, size = 0x8, scoped, tag = 'scoped memory for _patch_embed_impl.1']
    %8 = vsyncpa [#allocation3], 0
    %s9 = scalar_lea.sflag [#allocation3], 1
    %10 = vsyncpa %s9, 0
    loop: start=0, step=1, limit=6
    $region2: #{_patch_embed_impl.1} parent=1 // loop_pre_header
      _
    $region3: #{_patch_embed_impl.1} parent=1 // loop_header
      %s12 = sphi 0, %s16
      %p13 = scmp.ge.s32.totalorder %s12, 6
      %s22 = sphi 0, %s24
      %s25 = sphi 0, %s22
      %s26 = sphi 0, %s25
      %s42 = sphi 0, %s26
      %s46 = sphi 0, %s46
      %s48 = sphi 0, %s46
      %s49 = sphi 0, %s48
      %s63 = sphi 0, %s49
      %s67 = sphi 0, %s67
      %s69 = sphi 0, %s67
      %s70 = sphi 0, %s69
      %s84 = sphi 0, %s70
      %s90 = sphi 0, %s92
      %s93 = sphi 0, %s90
      %s94 = sphi 0, %s93
      %s110 = sphi 0, %s94
    $region4: #{_patch_embed_impl.1} parent=1 // loop_header_branch
      %15 = sbr.rel (%p13) target = $region8
    $region5: #{_patch_embed_impl.1} parent=1 // loop_body
      %s17 = ssub.s32 %s12, 1
      %s18 = ssub.s32 %s12, 2
      %s19 = sadd.s32 %s12, 1
      %s20 = ssub.s32 %s12, %s19
      %p21 = scmp.eq.s32.totalorder %s20, 0
      %s23 = sadd.s32 %s22, 1
      %s24 = scalar_select %p21, %s22, %s23
      %p27 = pneg %p21
      %p28 = scmp.eq.s32.totalorder %s12, 3
      %p29 = por %p27, %p28
      %p30 = scmp.ne.s32.totalorder %s22, %s25
      %p31 = scmp.eq.s32.totalorder %s12, 0
      %p32 = por %p30, %p31
      %p33 = scmp.ne.s32.totalorder %s22, %s25
      %p34 = scmp.eq.s32.totalorder %s17, 3
      %p35 = por %p33, %p34
      %p36 = scmp.ne.s32.totalorder %s25, %s26
      %p37 = scmp.eq.s32.totalorder %s17, 0
      %p38 = por %p36, %p37
      %p39 = scmp.ne.s32.totalorder %s25, %s26
      %p40 = scmp.eq.s32.totalorder %s18, 3
      %p41 = por %p39, %p40
      %p43 = scmp.ne.s32.totalorder %s26, %s42
      %p44 = scmp.eq.s32.totalorder %s18, 0
      %p45 = por %p43, %p44
      %s47 = sadd.s32 %s46, 1
      %p50 = scmp.eq.s32.totalorder %s12, 3
      %p51 = scmp.ne.s32.totalorder %s46, %s48
      %p52 = scmp.eq.s32.totalorder %s12, 0
      %p53 = por %p51, %p52
      %p54 = scmp.ne.s32.totalorder %s46, %s48
      %p55 = scmp.eq.s32.totalorder %s17, 3
      %p56 = por %p54, %p55
      %p57 = scmp.ne.s32.totalorder %s48, %s49
      %p58 = scmp.eq.s32.totalorder %s17, 0
      %p59 = por %p57, %p58
      %p60 = scmp.ne.s32.totalorder %s48, %s49
      %p61 = scmp.eq.s32.totalorder %s18, 3
      %p62 = por %p60, %p61
      %p64 = scmp.ne.s32.totalorder %s49, %s63
      %p65 = scmp.eq.s32.totalorder %s18, 0
      %p66 = por %p64, %p65
      %s68 = sadd.s32 %s67, 1
      %p71 = scmp.eq.s32.totalorder %s12, 3
      %p72 = scmp.ne.s32.totalorder %s67, %s69
      %p73 = scmp.eq.s32.totalorder %s12, 0
      %p74 = por %p72, %p73
      %p75 = scmp.ne.s32.totalorder %s67, %s69
      %p76 = scmp.eq.s32.totalorder %s17, 3
      %p77 = por %p75, %p76
      %p78 = scmp.ne.s32.totalorder %s69, %s70
      %p79 = scmp.eq.s32.totalorder %s17, 0
      %p80 = por %p78, %p79
      %p81 = scmp.ne.s32.totalorder %s69, %s70
      %p82 = scmp.eq.s32.totalorder %s18, 3
      %p83 = por %p81, %p82
      %p85 = scmp.ne.s32.totalorder %s70, %s84
      %p86 = scmp.eq.s32.totalorder %s18, 0
      %p87 = por %p85, %p86
      %s88 = ssub.s32 %s12, %s19
      %p89 = scmp.eq.s32.totalorder %s88, 0
      %s91 = sadd.s32 %s90, 1
      %s92 = scalar_select %p89, %s90, %s91
      %p95 = pneg %p89
      %p96 = scmp.eq.s32.totalorder %s12, 3
      %p97 = por %p95, %p96
      %p98 = scmp.ne.s32.totalorder %s90, %s93
      %p99 = scmp.eq.s32.totalorder %s12, 0
      %p100 = por %p98, %p99
      %p101 = scmp.ne.s32.totalorder %s90, %s93
      %p102 = scmp.eq.s32.totalorder %s17, 3
      %p103 = por %p101, %p102
      %p104 = scmp.ne.s32.totalorder %s93, %s94
      %p105 = scmp.eq.s32.totalorder %s17, 0
      %p106 = por %p104, %p105
      %p107 = scmp.ne.s32.totalorder %s93, %s94
      %p108 = scmp.eq.s32.totalorder %s18, 3
      %p109 = por %p107, %p108
      %p111 = scmp.ne.s32.totalorder %s94, %s110
      %p112 = scmp.eq.s32.totalorder %s18, 0
      %p113 = por %p111, %p112
      %p114 = scmp.le.s32.totalorder 1, %s12
      %p115 = scmp.lt.s32.totalorder %s12, 5
      %p116 = pnand %p114, %p115
      %p117 = pneg %p116
      // Predicated region
      $region9: #{_patch_embed_impl.1} parent=5 // pred_check
        _
      $region10: #{_patch_embed_impl.1} parent=5 // pred_check_branch
        %119 = sbr.rel (%p116) target = $region12
      $region11: #{_patch_embed_impl.1} parent=5 // pred_region
        %s120 = ssub.s32 %s12, 1
        // Predicated region
        $region13: #{_patch_embed_impl.1} parent=11 // pred_check
          %p121 = pneg %p59
        $region14: #{_patch_embed_impl.1} parent=11 // pred_check_branch
          %123 = sbr.rel (%p121) target = $region16
        $region15: #{_patch_embed_impl.1} parent=11 // pred_region
          _
        $region16: #{_patch_embed_impl.1} parent=11 // pred_fallthru
          _
        // Predicated region
        $region17: #{_patch_embed_impl.1} parent=11 // pred_check
          %p124 = pneg %p80
        $region18: #{_patch_embed_impl.1} parent=11 // pred_check_branch
          %126 = sbr.rel (%p124) target = $region20
        $region19: #{_patch_embed_impl.1} parent=11 // pred_region
          _
        $region20: #{_patch_embed_impl.1} parent=11 // pred_fallthru
          _
      $region12: #{_patch_embed_impl.1} parent=5 // pred_fallthru
        _
      %p127 = scmp.lt.s32.totalorder %s12, 4
      // Predicated region
      $region21: #{_patch_embed_impl.1} parent=5 // pred_check
        %p128 = pneg %p127
      $region22: #{_patch_embed_impl.1} parent=5 // pred_check_branch
        %130 = sbr.rel (%p128) target = $region24
      $region23: #{_patch_embed_impl.1} parent=5 // pred_region
        // Predicated region
        $region25: #{_patch_embed_impl.1} parent=23 // pred_check
          %p131 = pneg %p32
        $region26: #{_patch_embed_impl.1} parent=23 // pred_check_branch
          %133 = sbr.rel (%p131) target = $region28
        $region27: #{_patch_embed_impl.1} parent=23 // pred_region
          %p134 = scmp.lt.s32.totalorder %s12, 3
          %s135 = scalar_select %p134, %s12, 3
          %s136 = smul.addr %s135, 4
          %s137 = scalar_lea.vmem %s0, %s136
        $region28: #{_patch_embed_impl.1} parent=23 // pred_fallthru
          _
      $region24: #{_patch_embed_impl.1} parent=5 // pred_fallthru
        _
      %p138 = scmp.le.s32.totalorder 1, %s12
      %p139 = scmp.lt.s32.totalorder %s12, 5
      %p140 = pnand %p138, %p139
      %p141 = pneg %p140
      // Predicated region
      $region29: #{_patch_embed_impl.1} parent=5 // pred_check
        _
      $region30: #{_patch_embed_impl.1} parent=5 // pred_check_branch
        %143 = sbr.rel (%p140) target = $region32
      $region31: #{_patch_embed_impl.1} parent=5 // pred_region
        %s144 = ssub.s32 %s12, 1
        %p145 = scmp.lt.s32.totalorder %s17, 3
        %s146 = scalar_select %p145, %s17, 3
        %s147 = smul.addr %s146, 4
        %s148 = scalar_lea.vmem %s0, %s147
        %p149 = pneg %p38
        %p150 = pneg %p35
        %p151 = pneg %p59
        %p152 = pneg %p56
        %p153 = pneg %p80
        %p154 = pneg %p77
        %p155 = pneg %p106
        %p156 = pneg %p103
        %s157 = sand.u32 %s93, 1
        %s158 = scalar_lea.sflag [#allocation3], %s157
        %s159 = sand.u32 %s93, 1
        %s160 = smul.addr %s159, 8
        %s161 = scalar_lea.vmem [#allocation2], %s160
        %p162 = scmp.lt.s32.totalorder %s17, 3
        %s163 = scalar_select %p162, %s17, 3
        %s164 = smul.addr %s163, 4
        %s165 = scalar_lea.vmem %s0, %s164
        %v167 = vld [vmem:[%s165] sm:$0xf]
        %v168 = vld [vmem:[%s1] sm:$0xf]
        %v169 = vld [vmem:[%s1 + $0x4] sm:$0xf]
        %v170 = vld [vmem:[%s1 + $0x8] sm:$0xf]
        %v171 = vld [vmem:[%s1 + $0xc] sm:$0xf]
        %v172 = vld [vmem:[%s1 + $0x10] sm:$0xf]
        %v173 = vld [vmem:[%s1 + $0x14] sm:$0xf]
        %v174 = vld [vmem:[%s1 + $0x18] sm:$0xf]
        %v175 = vld [vmem:[%s1 + $0x1c] sm:$0xf]
        %v176 = vld [vmem:[%s2] sm:$0x1]
        %v178 = vlaneseq
        %v179 = vshrl.u32 %v178, 7
        %v180 = vsub.s32 0, %v179
        %v181 = vrot.slane %v176, %v180
        %v191 = vunpack.c.l.b16 %v168
        %v192 = vunpack.c.l.b16 %v169
        %v193 = vunpack.c.l.b16 %v170
        %v194 = vunpack.c.l.b16 %v171
        %v195 = vunpack.c.l.b16 %v172
        %v196 = vunpack.c.l.b16 %v173
        %v197 = vunpack.c.l.b16 %v174
        %v198 = vunpack.c.l.b16 %v175
        %v199 = vpack.c.b16 %v192, %v191
        %v200 = vpack.c.b16 %v194, %v193
        %v201 = vpack.c.b16 %v196, %v195
        %v202 = vpack.c.b16 %v198, %v197
        %vm207 = vcmask 523264
        %v209 = vsel %vm207, %v167, 0
        %211 = vmatprep.subr.bf16.mxu0 0
        %212 = vmatpush1.bf16.msra.mxu0 %v199
        %213 = vmatprep.subr.bf16.mxu0 0
        %214 = vmatpush1.bf16.msra.mxu0 %v200
        %215 = vmatprep.subr.bf16.mxu0 0
        %216 = vmatpush1.bf16.msra.mxu0 %v201
        %217 = vmatprep.subr.bf16.mxu0 0
        %218 = vmatpush1.bf16.msra.mxu0 %v202
        %219 = vmatprep.subr.bf16.mxu0 0
        %220 = vmatpush1.bf16.msra.mxu0 0
        %221 = vmatprep.subr.bf16.mxu0 0
        %222 = vmatpush1.bf16.msra.mxu0 0
        %223 = vmatprep.subr.bf16.mxu0 0
        %224 = vmatpush1.bf16.msra.mxu0 0
        %225 = vmatprep.subr.bf16.mxu0 0
        %226 = vmatpush1.bf16.msra.mxu0 0
        %227 = vmatprep.subr.bf16.mxu0 0
        %228 = vmatpush1.bf16.msra.mxu0 0
        %229 = vmatprep.subr.bf16.mxu0 0
        %230 = vmatpush1.bf16.msra.mxu0 0
        %231 = vmatprep.subr.bf16.mxu0 0
        %232 = vmatpush1.bf16.msra.mxu0 0
        %233 = vmatprep.subr.bf16.mxu0 0
        %234 = vmatpush1.bf16.msra.mxu0 0
        %235 = vmatprep.subr.bf16.mxu0 0
        %236 = vmatpush1.bf16.msra.mxu0 0
        %237 = vmatprep.subr.bf16.mxu0 0
        %238 = vmatpush1.bf16.msra.mxu0 0
        %239 = vmatprep.subr.bf16.mxu0 0
        %240 = vmatpush1.bf16.msra.mxu0 0
        %241 = vmatprep.subr.bf16.mxu0 0
        %242 = vmatpush1.bf16.msra.mxu0 0
        %243 = vmatprep.mubr.bf16.mxu0 0
        %244 = vmatmul.mubr.bf16.gmra.mrb[0].mxu0 %v209
        %v245 = vpop.f32.mrb[0].mxu0
        %v246 = vadd.f32 %v181, %v245
        %v247 = vpop.f32.mrb[0].mxu0
        %v248 = vpop.f32.mrb[0].mxu0
        %v249 = vpop.f32.mrb[0].mxu0
        %250 = vdwg.mxu0
        %vm251 = vcmask 261120
        %252 = vst.msk [vmem:[%s161] sm:$0xff] %vm251, %v246
        %s253 = sand.u32 %s93, 1
        %s254 = scalar_lea.sflag [#allocation3], %s253
        %s255 = sand.u32 %s93, 1
        %s256 = smul.addr %s255, 8
        %s257 = scalar_lea.vmem [#allocation2], %s256
        // Predicated region
        $region33: #{_patch_embed_impl.1} parent=31 // pred_check
          %p258 = pneg %p103
        $region34: #{_patch_embed_impl.1} parent=31 // pred_check_branch
          %260 = sbr.rel (%p258) target = $region36
        $region35: #{_patch_embed_impl.1} parent=31 // pred_region
          %s262 = ssub.s32 128, 128
          %263 = vsyncadd %s254, %s262
          %s264 = smul.addr %s17, 128
          %s265 = scalar_lea.hbm %s3, %s264
          %s267 = sshll.u32 %s257, 4
          %s268 = int_to_ptr.vmem [resolvable:$true] %s267
          %270 = dma.vmem_to_hbm [thread:$0]  %s268, 128, %s265, %s254
        $region36: #{_patch_embed_impl.1} parent=31 // pred_fallthru
          _
      $region32: #{_patch_embed_impl.1} parent=5 // pred_fallthru
        _
      %p271 = scmp.le.s32.totalorder 2, %s12
      // Predicated region
      $region37: #{_patch_embed_impl.1} parent=5 // pred_check
        %p272 = pneg %p271
      $region38: #{_patch_embed_impl.1} parent=5 // pred_check_branch
        %274 = sbr.rel (%p272) target = $region40
      $region39: #{_patch_embed_impl.1} parent=5 // pred_region
        %s275 = ssub.s32 %s12, 2
        // Predicated region
        $region41: #{_patch_embed_impl.1} parent=39 // pred_check
          %p276 = pneg %p109
        $region42: #{_patch_embed_impl.1} parent=39 // pred_check_branch
          %278 = sbr.rel (%p276) target = $region44
        $region43: #{_patch_embed_impl.1} parent=39 // pred_region
          %s279 = sand.u32 %s94, 1
          %s280 = scalar_lea.sflag [#allocation3], %s279
          %s281 = sand.u32 %s94, 1
          %s282 = smul.addr %s281, 8
          %s283 = scalar_lea.vmem [#allocation2], %s282
          %284 = dma.done %s280, 128
        $region44: #{_patch_embed_impl.1} parent=39 // pred_fallthru
          _
      $region40: #{_patch_embed_impl.1} parent=5 // pred_fallthru
        _
    $region6: #{_patch_embed_impl.1} parent=1 // loop_footer
      %s16 = sadd.s32 1, %s12
    $region7: #{_patch_embed_impl.1} parent=1 // loop_footer_branch
      %11 = sbr.rel target = $region3
    $region8: #{_patch_embed_impl.1} parent=1 // loop_exit
      _
    %285 = vsyncpa [#allocation3], 1
    %s286 = scalar_lea.sflag [#allocation3], 1
    %287 = vsyncpa %s286, 1

// kernel: _patch_embed_impl.1
$region0: #{_patch_embed_impl.1}
  #allocation0 [shape = 'u32[]', space=smem, size = 0x4, offset = 0x4, fixed_abs, tag = 'smem constant byte address 0x4 - core index']
  #allocation1 [shape = 'u32[144,128]{1,0:T(1,128)}', space=vmem, size = 0x12000, scoped, tag = 'internal scratch']
  %s0 = inlined_call_operand.vmem [shape: bf16[32,64], index: 0, kind: input, shape index: {}]
  %s1 = inlined_call_operand.vmem [shape: bf16[64,32], index: 1, kind: input, shape index: {}]
  %s2 = inlined_call_operand.vmem [shape: f32[1,32], index: 2, kind: input, shape index: {}]
  %s3 = inlined_call_operand.hbm [shape: f32[32,32], index: 3, kind: output, shape index: {}]
  %s4 = sld [smem:[#allocation0]]
  $region45: #{_patch_embed_impl.1} parent=0
    _
  %s6 = ssub.s32 1, %s4
  %s7 = scalar_select 0, %s6, %s4
  $region1: #{_patch_embed_impl.1} parent=0
    #allocation2 [shape = 'u8[8192]{0}', space=vmem, size = 0x2000, scoped, tag = 'output window, operand 0']
    #allocation3 [shape = 's32[2]{0}', space=sflag, size = 0x8, scoped, tag = 'scoped memory for _patch_embed_impl.1']
    %8 = vsyncpa [#allocation3], 0
    %s9 = scalar_lea.sflag [#allocation3], 1
    %10 = vsyncpa %s9, 0
    loop: start=0, step=1, limit=6
    $region2: #{_patch_embed_impl.1} parent=1 // loop_pre_header
      _
    $region3: #{_patch_embed_impl.1} parent=1 // loop_header
      %s12 = sphi 0, %s16
      %p13 = scmp.ge.s32.totalorder %s12, 6
      %s22 = sphi 0, %s24
      %s25 = sphi 0, %s22
      %s26 = sphi 0, %s25
      %s42 = sphi 0, %s26
      %s46 = sphi 0, %s46
      %s48 = sphi 0, %s46
      %s49 = sphi 0, %s48
      %s63 = sphi 0, %s49
      %s67 = sphi 0, %s67
      %s69 = sphi 0, %s67
      %s70 = sphi 0, %s69
      %s84 = sphi 0, %s70
      %s90 = sphi 0, %s92
      %s93 = sphi 0, %s90
      %s94 = sphi 0, %s93
      %s110 = sphi 0, %s94
    $region4: #{_patch_embed_impl.1} parent=1 // loop_header_branch
      %15 = sbr.rel (%p13) target = $region8
    $region5: #{_patch_embed_impl.1} parent=1 // loop_body
      %s17 = ssub.s32 %s12, 1
      %s18 = ssub.s32 %s12, 2
      %s19 = sadd.s32 %s12, 1
      %s20 = ssub.s32 %s12, %s19
      %p21 = scmp.eq.s32.totalorder %s20, 0
      %s23 = sadd.s32 %s22, 1
      %s24 = scalar_select %p21, %s22, %s23
      %p27 = pneg %p21
      %p28 = scmp.eq.s32.totalorder %s12, 3
      %p29 = por %p27, %p28
      %p30 = scmp.ne.s32.totalorder %s22, %s25
      %p31 = scmp.eq.s32.totalorder %s12, 0
      %p32 = por %p30, %p31
      %p33 = scmp.ne.s32.totalorder %s22, %s25
      %p34 = scmp.eq.s32.totalorder %s17, 3
      %p35 = por %p33, %p34
      %p36 = scmp.ne.s32.totalorder %s25, %s26
      %p37 = scmp.eq.s32.totalorder %s17, 0
      %p38 = por %p36, %p37
      %p39 = scmp.ne.s32.totalorder %s25, %s26
      %p40 = scmp.eq.s32.totalorder %s18, 3
      %p41 = por %p39, %p40
      %p43 = scmp.ne.s32.totalorder %s26, %s42
      %p44 = scmp.eq.s32.totalorder %s18, 0
      %p45 = por %p43, %p44
      %s47 = sadd.s32 %s46, 1
      %p50 = scmp.eq.s32.totalorder %s12, 3
      %p51 = scmp.ne.s32.totalorder %s46, %s48
      %p52 = scmp.eq.s32.totalorder %s12, 0
      %p53 = por %p51, %p52
      %p54 = scmp.ne.s32.totalorder %s46, %s48
      %p55 = scmp.eq.s32.totalorder %s17, 3
      %p56 = por %p54, %p55
      %p57 = scmp.ne.s32.totalorder %s48, %s49
      %p58 = scmp.eq.s32.totalorder %s17, 0
      %p59 = por %p57, %p58
      %p60 = scmp.ne.s32.totalorder %s48, %s49
      %p61 = scmp.eq.s32.totalorder %s18, 3
      %p62 = por %p60, %p61
      %p64 = scmp.ne.s32.totalorder %s49, %s63
      %p65 = scmp.eq.s32.totalorder %s18, 0
      %p66 = por %p64, %p65
      %s68 = sadd.s32 %s67, 1
      %p71 = scmp.eq.s32.totalorder %s12, 3
      %p72 = scmp.ne.s32.totalorder %s67, %s69
      %p73 = scmp.eq.s32.totalorder %s12, 0
      %p74 = por %p72, %p73
      %p75 = scmp.ne.s32.totalorder %s67, %s69
      %p76 = scmp.eq.s32.totalorder %s17, 3
      %p77 = por %p75, %p76
      %p78 = scmp.ne.s32.totalorder %s69, %s70
      %p79 = scmp.eq.s32.totalorder %s17, 0
      %p80 = por %p78, %p79
      %p81 = scmp.ne.s32.totalorder %s69, %s70
      %p82 = scmp.eq.s32.totalorder %s18, 3
      %p83 = por %p81, %p82
      %p85 = scmp.ne.s32.totalorder %s70, %s84
      %p86 = scmp.eq.s32.totalorder %s18, 0
      %p87 = por %p85, %p86
      %s88 = ssub.s32 %s12, %s19
      %p89 = scmp.eq.s32.totalorder %s88, 0
      %s91 = sadd.s32 %s90, 1
      %s92 = scalar_select %p89, %s90, %s91
      %p95 = pneg %p89
      %p96 = scmp.eq.s32.totalorder %s12, 3
      %p97 = por %p95, %p96
      %p98 = scmp.ne.s32.totalorder %s90, %s93
      %p99 = scmp.eq.s32.totalorder %s12, 0
      %p100 = por %p98, %p99
      %p101 = scmp.ne.s32.totalorder %s90, %s93
      %p102 = scmp.eq.s32.totalorder %s17, 3
      %p103 = por %p101, %p102
      %p104 = scmp.ne.s32.totalorder %s93, %s94
      %p105 = scmp.eq.s32.totalorder %s17, 0
      %p106 = por %p104, %p105
      %p107 = scmp.ne.s32.totalorder %s93, %s94
      %p108 = scmp.eq.s32.totalorder %s18, 3
      %p109 = por %p107, %p108
      %p111 = scmp.ne.s32.totalorder %s94, %s110
      %p112 = scmp.eq.s32.totalorder %s18, 0
      %p113 = por %p111, %p112
      %p114 = scmp.le.s32.totalorder 1, %s12
      %p115 = scmp.lt.s32.totalorder %s12, 5
      %p116 = pnand %p114, %p115
      %p117 = pneg %p116
      // Predicated region
      $region9: #{_patch_embed_impl.1} parent=5 // pred_check
        _
      $region10: #{_patch_embed_impl.1} parent=5 // pred_check_branch
        %119 = sbr.rel (%p116) target = $region12
      $region11: #{_patch_embed_impl.1} parent=5 // pred_region
        %s120 = ssub.s32 %s12, 1
        // Predicated region
        $region13: #{_patch_embed_impl.1} parent=11 // pred_check
          %p121 = pneg %p59
        $region14: #{_patch_embed_impl.1} parent=11 // pred_check_branch
          %123 = sbr.rel (%p121) target = $region16
        $region15: #{_patch_embed_impl.1} parent=11 // pred_region
          _
        $region16: #{_patch_embed_impl.1} parent=11 // pred_fallthru
          _
        // Predicated region
        $region17: #{_patch_embed_impl.1} parent=11 // pred_check
          %p124 = pneg %p80
        $region18: #{_patch_embed_impl.1} parent=11 // pred_check_branch
          %126 = sbr.rel (%p124) target = $region20
        $region19: #{_patch_embed_impl.1} parent=11 // pred_region
          _
        $region20: #{_patch_embed_impl.1} parent=11 // pred_fallthru
          _
      $region12: #{_patch_embed_impl.1} parent=5 // pred_fallthru
        _
      %p127 = scmp.lt.s32.totalorder %s12, 4
      // Predicated region
      $region21: #{_patch_embed_impl.1} parent=5 // pred_check
        %p128 = pneg %p127
      $region22: #{_patch_embed_impl.1} parent=5 // pred_check_branch
        %130 = sbr.rel (%p128) target = $region24
      $region23: #{_patch_embed_impl.1} parent=5 // pred_region
        // Predicated region
        $region25: #{_patch_embed_impl.1} parent=23 // pred_check
          %p131 = pneg %p32
        $region26: #{_patch_embed_impl.1} parent=23 // pred_check_branch
          %133 = sbr.rel (%p131) target = $region28
        $region27: #{_patch_embed_impl.1} parent=23 // pred_region
          %p134 = scmp.lt.s32.totalorder %s12, 3
          %s135 = scalar_select %p134, %s12, 3
          %s136 = smul.addr %s135, 4
          %s137 = scalar_lea.vmem %s0, %s136
        $region28: #{_patch_embed_impl.1} parent=23 // pred_fallthru
          _
      $region24: #{_patch_embed_impl.1} parent=5 // pred_fallthru
        _
      %p138 = scmp.le.s32.totalorder 1, %s12
      %p139 = scmp.lt.s32.totalorder %s12, 5
      %p140 = pnand %p138, %p139
      %p141 = pneg %p140
      // Predicated region
      $region29: #{_patch_embed_impl.1} parent=5 // pred_check
        _
      $region30: #{_patch_embed_impl.1} parent=5 // pred_check_branch
        %143 = sbr.rel (%p140) target = $region32
      $region31: #{_patch_embed_impl.1} parent=5 // pred_region
        %s144 = ssub.s32 %s12, 1
        %p145 = scmp.lt.s32.totalorder %s17, 3
        %s146 = scalar_select %p145, %s17, 3
        %s147 = smul.addr %s146, 4
        %s148 = scalar_lea.vmem %s0, %s147
        %p149 = pneg %p38
        %p150 = pneg %p35
        %p151 = pneg %p59
        %p152 = pneg %p56
        %p153 = pneg %p80
        %p154 = pneg %p77
        %p155 = pneg %p106
        %p156 = pneg %p103
        %s157 = sand.u32 %s93, 1
        %s158 = scalar_lea.sflag [#allocation3], %s157
        %s159 = sand.u32 %s93, 1
        %s160 = smul.addr %s159, 8
        %s161 = scalar_lea.vmem [#allocation2], %s160
        %p162 = scmp.lt.s32.totalorder %s17, 3
        %s163 = scalar_select %p162, %s17, 3
        %s164 = smul.addr %s163, 4
        %s165 = scalar_lea.vmem %s0, %s164
        %v167 = vld [vmem:[%s165] sm:$0xf]
        %v168 = vld [vmem:[%s1] sm:$0xf]
        %v169 = vld [vmem:[%s1 + $0x4] sm:$0xf]
        %v170 = vld [vmem:[%s1 + $0x8] sm:$0xf]
        %v171 = vld [vmem:[%s1 + $0xc] sm:$0xf]
        %v172 = vld [vmem:[%s1 + $0x10] sm:$0xf]
        %v173 = vld [vmem:[%s1 + $0x14] sm:$0xf]
        %v174 = vld [vmem:[%s1 + $0x18] sm:$0xf]
        %v175 = vld [vmem:[%s1 + $0x1c] sm:$0xf]
        %v176 = vld [vmem:[%s2] sm:$0x1]
        %v178 = vlaneseq
        %v179 = vshrl.u32 %v178, 7
        %v180 = vsub.s32 0, %v179
        %v181 = vrot.slane %v176, %v180
        %v191 = vunpack.c.l.b16 %v168
        %v192 = vunpack.c.l.b16 %v169
        %v193 = vunpack.c.l.b16 %v170
        %v194 = vunpack.c.l.b16 %v171
        %v195 = vunpack.c.l.b16 %v172
        %v196 = vunpack.c.l.b16 %v173
        %v197 = vunpack.c.l.b16 %v174
        %v198 = vunpack.c.l.b16 %v175
        %v199 = vpack.c.b16 %v192, %v191
        %v200 = vpack.c.b16 %v194, %v193
        %v201 = vpack.c.b16 %v196, %v195
        %v202 = vpack.c.b16 %v198, %v197
        %vm207 = vcmask 523264
        %v209 = vsel %vm207, %v167, 0
        %211 = vmatprep.subr.bf16.mxu0 0
        %212 = vmatpush1.bf16.msra.mxu0 %v199
        %213 = vmatprep.subr.bf16.mxu0 0
        %214 = vmatpush1.bf16.msra.mxu0 %v200
        %215 = vmatprep.subr.bf16.mxu0 0
        %216 = vmatpush1.bf16.msra.mxu0 %v201
        %217 = vmatprep.subr.bf16.mxu0 0
        %218 = vmatpush1.bf16.msra.mxu0 %v202
        %219 = vmatprep.subr.bf16.mxu0 0
        %220 = vmatpush1.bf16.msra.mxu0 0
        %221 = vmatprep.subr.bf16.mxu0 0
        %222 = vmatpush1.bf16.msra.mxu0 0
        %223 = vmatprep.subr.bf16.mxu0 0
        %224 = vmatpush1.bf16.msra.mxu0 0
        %225 = vmatprep.subr.bf16.mxu0 0
        %226 = vmatpush1.bf16.msra.mxu0 0
        %227 = vmatprep.subr.bf16.mxu0 0
        %228 = vmatpush1.bf16.msra.mxu0 0
        %229 = vmatprep.subr.bf16.mxu0 0
        %230 = vmatpush1.bf16.msra.mxu0 0
        %231 = vmatprep.subr.bf16.mxu0 0
        %232 = vmatpush1.bf16.msra.mxu0 0
        %233 = vmatprep.subr.bf16.mxu0 0
        %234 = vmatpush1.bf16.msra.mxu0 0
        %235 = vmatprep.subr.bf16.mxu0 0
        %236 = vmatpush1.bf16.msra.mxu0 0
        %237 = vmatprep.subr.bf16.mxu0 0
        %238 = vmatpush1.bf16.msra.mxu0 0
        %239 = vmatprep.subr.bf16.mxu0 0
        %240 = vmatpush1.bf16.msra.mxu0 0
        %241 = vmatprep.subr.bf16.mxu0 0
        %242 = vmatpush1.bf16.msra.mxu0 0
        %243 = vmatprep.mubr.bf16.mxu0 0
        %244 = vmatmul.mubr.bf16.gmra.mrb[0].mxu0 %v209
        %v245 = vpop.f32.mrb[0].mxu0
        %v246 = vadd.f32 %v181, %v245
        %v247 = vpop.f32.mrb[0].mxu0
        %v248 = vpop.f32.mrb[0].mxu0
        %v249 = vpop.f32.mrb[0].mxu0
        %250 = vdwg.mxu0
        %vm251 = vcmask 261120
        %252 = vst.msk [vmem:[%s161] sm:$0xff] %vm251, %v246
        %s253 = sand.u32 %s93, 1
        %s254 = scalar_lea.sflag [#allocation3], %s253
        %s255 = sand.u32 %s93, 1
        %s256 = smul.addr %s255, 8
        %s257 = scalar_lea.vmem [#allocation2], %s256
        // Predicated region
        $region33: #{_patch_embed_impl.1} parent=31 // pred_check
          %p258 = pneg %p103
        $region34: #{_patch_embed_impl.1} parent=31 // pred_check_branch
          %260 = sbr.rel (%p258) target = $region36
        $region35: #{_patch_embed_impl.1} parent=31 // pred_region
          %s262 = ssub.s32 128, 128
          %263 = vsyncadd %s254, %s262
          %s264 = smul.addr %s17, 128
          %s265 = scalar_lea.hbm %s3, %s264
          %s267 = sshll.u32 %s257, 4
          %s268 = int_to_ptr.vmem [resolvable:$true] %s267
          %270 = dma.vmem_to_hbm [thread:$0]  %s268, 128, %s265, %s254
        $region36: #{_patch_embed_impl.1} parent=31 // pred_fallthru
          _
      $region32: #{_patch_embed_impl.1} parent=5 // pred_fallthru
        _
      %p271 = scmp.le.s32.totalorder 2, %s12
      // Predicated region
      $region37: #{_patch_embed_impl.1} parent=5 // pred_check
        %p272 = pneg %p271
      $region38: #{_patch_embed_impl.1} parent=5 // pred_check_branch
        %274 = sbr.rel (%p272) target = $region40
      $region39: #{_patch_embed_impl.1} parent=5 // pred_region
        %s275 = ssub.s32 %s12, 2
        // Predicated region
        $region41: #{_patch_embed_impl.1} parent=39 // pred_check
          %p276 = pneg %p109
        $region42: #{_patch_embed_impl.1} parent=39 // pred_check_branch
          %278 = sbr.rel (%p276) target = $region44
        $region43: #{_patch_embed_impl.1} parent=39 // pred_region
          %s279 = sand.u32 %s94, 1
          %s280 = scalar_lea.sflag [#allocation3], %s279
          %s281 = sand.u32 %s94, 1
          %s282 = smul.addr %s281, 8
          %s283 = scalar_lea.vmem [#allocation2], %s282
          %284 = dma.done %s280, 128
        $region44: #{_patch_embed_impl.1} parent=39 // pred_fallthru
          _
      $region40: #{_patch_embed_impl.1} parent=5 // pred_fallthru
        _
    $region6: #{_patch_embed_impl.1} parent=1 // loop_footer
      %s16 = sadd.s32 1, %s12
    $region7: #{_patch_embed_impl.1} parent=1 // loop_footer_branch
      %11 = sbr.rel target = $region3
    $region8: #{_patch_embed_impl.1} parent=1 // loop_exit
      _
    %285 = vsyncpa [#allocation3], 1
    %s286 = scalar_lea.sflag [#allocation3], 1
    %287 = vsyncpa %s286, 1

</llo_original>
